<compile_context>
chip_gen: v5e
topology: v5e:2x2
jax: 0.10.0
libtpu: 0.0.40
codegen_flags: <defaults>
</compile_context>

<pallas_src>
import jax
import jax.numpy as jnp
import numpy as np
from jax.experimental import pallas as pl
from jax.experimental.pallas import tpu as pltpu


def _round_up(x, m):
    return (x + m - 1) // m * m


def _char_cnn_highway_kernel(ids_ref, sel_ref, vpat_ref, w_band_ref, b_conv_ref,
                             w_hwy_ref, b_hwy_ref, out_ref):
    """Fused char-embed + conv-as-banded-matmul + ReLU + maxpool + Highway.

    ids_ref    : (TN, Mp)          int32  word char-ids (padded columns unused)
    sel_ref    : (Mp, M*Vp)        f32    lane-expansion matrix sel[m, j] = (j//Vp == m)
    vpat_ref   : (1, M*Vp)         f32    per-lane char-id pattern (j % Vp)
    w_band_ref : (M*Vp, m_out*E)   bf16   banded (char_emb @ conv) weight
    b_conv_ref : (1, m_out*E)      f32    conv bias tiled over output positions
    w_hwy_ref  : (E, 2E)           bf16   fused highway weight [W_proj | W_gate]
    b_hwy_ref  : (1, 2E)           f32    fused highway bias
    out_ref    : (TN, E)           f32    word embeddings for this tile
    """
    tn, e = out_ref.shape
    m_out = b_conv_ref.shape[1] // e

    # 1) Expand ids across lanes with a tiny MXU matmul (no cross-lane relayout):
    #    expanded[n, j] = ids[n, j // Vp].
    ids_f = ids_ref[...].astype(jnp.float32)                       # (TN, Mp)
    expanded = jnp.dot(ids_f, sel_ref[...],
                       preferred_element_type=jnp.float32)         # (TN, M*Vp)

    # 2) One-hot block: X[n, j] = (ids[n, j//Vp] == j % Vp). Tolerant compare so
    #    any tiny matmul rounding on the integer id values is harmless.
    onehot = jnp.where(jnp.abs(expanded - vpat_ref[...]) < 0.5,
                       1.0, 0.0).astype(jnp.bfloat16)              # (TN, M*Vp)

    # 3) Char-embedding + Conv1d folded into ONE banded MXU matmul, bias + ReLU.
    conv = jnp.dot(onehot, w_band_ref[...],
                   preferred_element_type=jnp.float32)             # (TN, m_out*E)
    conv = jnp.maximum(conv + b_conv_ref[...], 0.0)

    # 4) Max-pool over conv output positions — tree reduction (depth ~log2(m_out)).
    parts = [conv[:, p * e:(p + 1) * e] for p in range(m_out)]
    while len(parts) > 1:
        nxt = [jnp.maximum(a, b) for a, b in zip(parts[0::2], parts[1::2])]
        if len(parts) % 2:
            nxt.append(parts[-1])
        parts = nxt
    pooled = parts[0]                                              # (TN, E) f32

    # 5) Highway: one fused (E, 2E) matmul, split into proj / gate halves.
    h = jnp.dot(pooled.astype(w_hwy_ref.dtype), w_hwy_ref[...],
                preferred_element_type=jnp.float32) + b_hwy_ref[...]
    proj = jnp.maximum(h[:, :e], 0.0)
    gate = jax.nn.sigmoid(h[:, e:])
    hwy = gate * proj + (1.0 - gate) * pooled

    # Dropout(p=0.3): identity at inference time.
    # TODO(synk): training-mode dropout would use pltpu.prng_seed / prng_random_bits.
    # NOTE: demo E=32 makes the output store lane-sparse; production embed_size>=128
    # makes it a full unmasked vst (kept f32 for parity with the PyTorch module).
    out_ref[...] = hwy


def prepare_params(params, *, max_word_length):
    """One-time packing of ModelEmbeddings weights for the fused kernel."""
    emb = params["char_emb"].astype(jnp.float32)                   # (V, C)
    w_conv = params["w_conv"].astype(jnp.float32)                  # (K, C, E)
    V, _C = emb.shape
    K, _, E = w_conv.shape
    M = int(max_word_length)
    m_out = M - K + 1
    assert m_out >= 1, "max_word_length must be >= conv kernel_size"

    Vp = _round_up(V, 32)          # lane group per char position (demo: M*Vp = 384)
    Mp = _round_up(M, 8)           # padded width of the streamed int32 id block

    # Fold the char embedding into the conv weight: Wc[kk] = emb @ w_conv[kk].
    wc = jnp.einsum("vc,kce->kve", emb, w_conv)                    # (K, V, E) f32
    wc = jnp.pad(wc, ((0, 0), (0, Vp - V), (0, 0)))                # (K, Vp, E)

    # Banded block weight: W_band[m*Vp + v, p*E + e] = Wc[m - p][v, e], 0 <= m-p < K.
    w_band = jnp.zeros((M * Vp, m_out * E), jnp.float32)
    for p in range(m_out):
        for kk in range(K):
            m = p + kk
            w_band = w_band.at[m * Vp:(m + 1) * Vp, p * E:(p + 1) * E].set(wc[kk])
    w_band = w_band.astype(jnp.bfloat16)

    b_conv = jnp.tile(params["b_conv"].reshape(1, E).astype(jnp.float32),
                      (1, m_out))                                  # (1, m_out*E)

    # Lane-expansion matrix + per-lane compare pattern (build the one-hot in-kernel).
    cols = np.arange(M * Vp)
    sel = np.zeros((Mp, M * Vp), np.float32)
    sel[cols // Vp, cols] = 1.0                                    # rows m >= M stay 0
    v_pattern = (cols % Vp).astype(np.float32).reshape(1, M * Vp)

    # Fuse the two Highway matmuls into one (E, 2E) weight / (1, 2E) bias.
    w_hwy = jnp.concatenate([params["w_proj"], params["w_gate"]],
                            axis=1).astype(jnp.bfloat16)           # (E, 2E)
    b_hwy = jnp.concatenate([params["b_proj"].reshape(1, E),
                             params["b_gate"].reshape(1, E)],
                            axis=1).astype(jnp.float32)            # (1, 2E)

    return dict(sel=jnp.asarray(sel), v_pattern=jnp.asarray(v_pattern),
                w_band=w_band, b_conv=b_conv, w_hwy=w_hwy, b_hwy=b_hwy)


def model_embeddings_forward(input_ids, packed, *, tile_words=1024):
    """input_ids: (sentence_length, batch_size, max_word_length) int32.

    packed: output of prepare_params (hoisted, one-time weight packing).
    Returns (sentence_length, batch_size, embed_size) float32.
    """
    L, B, M = input_ids.shape
    sel = packed["sel"]
    v_pattern = packed["v_pattern"]
    w_band = packed["w_band"]
    b_conv = packed["b_conv"]
    w_hwy = packed["w_hwy"]
    b_hwy = packed["b_hwy"]

    Mp, MVp = sel.shape
    assert Mp >= M and MVp % M == 0, "packed params built for a different max_word_length"
    E = b_hwy.shape[1] // 2

    N = L * B
    ids = input_ids.reshape(N, M).astype(jnp.int32)

    # Word-tile: large lane-dense tiles (default 1024), rounded to 16 sublanes,
    # and >= 2 grid steps whenever possible so v7x can shard across its 2 TCs.
    TN = max(16, min(_round_up(tile_words, 16), _round_up(-(-N // 2), 16)))
    N_pad = _round_up(N, TN)
    # Pad the cheap int32 ids (tail rows discarded; extra id columns multiply
    # all-zero selection rows, so their values are irrelevant).
    ids = jnp.pad(ids, ((0, N_pad - N), (0, Mp - M)))

    grid = (N_pad // TN,)
    out = pl.pallas_call(
        _char_cnn_highway_kernel,
        out_shape=jax.ShapeDtypeStruct((N_pad, E), jnp.float32),
        grid=grid,
        in_specs=[
            pl.BlockSpec((TN, Mp), lambda i: (i, 0)),          # streamed word ids
            pl.BlockSpec(sel.shape, lambda i: (0, 0)),         # lane-expansion matrix
            pl.BlockSpec(v_pattern.shape, lambda i: (0, 0)),   # per-lane id pattern
            pl.BlockSpec(w_band.shape, lambda i: (0, 0)),      # banded emb@conv weight
            pl.BlockSpec(b_conv.shape, lambda i: (0, 0)),      # conv bias
            pl.BlockSpec(w_hwy.shape, lambda i: (0, 0)),       # fused highway weight
            pl.BlockSpec(b_hwy.shape, lambda i: (0, 0)),       # fused highway bias
        ],
        out_specs=pl.BlockSpec((TN, E), lambda i: (i, 0)),
        compiler_params=pltpu.CompilerParams(
            dimension_semantics=("parallel",)),                # megacore-friendly
    )(ids, sel, v_pattern, w_band, b_conv, w_hwy, b_hwy)

    return out[:N].reshape(L, B, E)


def init_params(key, *, vocab_size, char_embed_size, embed_size, kernel_size,
                pad_idx):
    ks = jax.random.split(key, 7)
    char_emb = 0.1 * jax.random.normal(
        ks[0], (vocab_size, char_embed_size), jnp.float32)
    # nn.Embedding(padding_idx=pad) initializes the pad row to zero.
    char_emb = char_emb.at[pad_idx].set(0.0)
    # Conv1d weight stored as (K, C, E); port from torch via weight.permute(2,1,0).
    w_conv = 0.05 * jax.random.normal(
        ks[1], (kernel_size, char_embed_size, embed_size), jnp.float32)
    b_conv = 0.01 * jax.random.normal(ks[2], (1, embed_size), jnp.float32)
    # Linear weights stored as (in, out); port from torch via weight.T.
    w_proj = 0.1 * jax.random.normal(ks[3], (embed_size, embed_size), jnp.float32)
    b_proj = 0.01 * jax.random.normal(ks[4], (1, embed_size), jnp.float32)
    w_gate = 0.1 * jax.random.normal(ks[5], (embed_size, embed_size), jnp.float32)
    b_gate = 0.01 * jax.random.normal(ks[6], (1, embed_size), jnp.float32)
    return dict(char_emb=char_emb, w_conv=w_conv, b_conv=b_conv,
                w_proj=w_proj, b_proj=b_proj, w_gate=w_gate, b_gate=b_gate)


def reference_forward(input_ids, params):
    """Pure-JAX f32 reference matching the PyTorch module (inference mode)."""
    emb = params["char_emb"]
    w_conv = params["w_conv"]                                   # (K, C, E)
    K, _, E = w_conv.shape
    L, B, M = input_ids.shape
    m_out = M - K + 1
    chars = emb[input_ids]                                      # (L, B, M, C)
    conv = params["b_conv"].reshape(1, 1, 1, E)
    for kk in range(K):
        conv = conv + jnp.einsum("lbmc,ce->lbme",
                                 chars[:, :, kk:kk + m_out, :], w_conv[kk])
    conv = jnp.maximum(conv, 0.0)
    pooled = conv.max(axis=2)                                   # (L, B, E)
    proj = jnp.maximum(pooled @ params["w_proj"] + params["b_proj"], 0.0)
    gate = jax.nn.sigmoid(pooled @ params["w_gate"] + params["b_gate"])
    return gate * proj + (1.0 - gate) * pooled


if __name__ == "__main__":
    # Small, module-consistent shapes.
    SENT_LEN = 8          # sentence_length
    BATCH = 2             # batch_size
    MAX_WORD_LEN = 12     # max_word_length (characters per word)
    VOCAB = 30            # character vocab size
    CHAR_EMBED = 50       # char_embed_size (fixed in the module)
    EMBED_SIZE = 32       # embed_size (= number of CNN filters)
    KERNEL = 5            # char-CNN kernel size
    PAD_IDX = 0

    key = jax.random.PRNGKey(0)
    k_param, k_input = jax.random.split(key)

    params = init_params(k_param, vocab_size=VOCAB, char_embed_size=CHAR_EMBED,
                         embed_size=EMBED_SIZE, kernel_size=KERNEL,
                         pad_idx=PAD_IDX)
    input_tensor = jax.random.randint(
        k_input, (SENT_LEN, BATCH, MAX_WORD_LEN), 0, VOCAB, dtype=jnp.int32)

    # One-time weight packing, hoisted out of the per-call forward.
    packed = prepare_params(params, max_word_length=MAX_WORD_LEN)

    forward = jax.jit(model_embeddings_forward)
    out = jax.block_until_ready(forward(input_tensor, packed))

    assert out.shape == (SENT_LEN, BATCH, EMBED_SIZE)
    assert out.dtype == jnp.float32

    ref = reference_forward(input_tensor, params)
    np.testing.assert_allclose(np.asarray(out), np.asarray(ref),
                               rtol=5e-2, atol=1e-2)

    print("KERNEL_OK")
</pallas_src>

<mosaic_0001>
module attributes {stable_mosaic.version = 11 : i64} {
  func.func @_char_cnn_highway_kernel(%arg0: i32, %arg1: memref<16x16xi32, #tpu.memory_space<vmem>>, %arg2: memref<16x384xf32, #tpu.memory_space<vmem>>, %arg3: memref<1x384xf32, #tpu.memory_space<vmem>>, %arg4: memref<384x256xbf16, #tpu.memory_space<vmem>>, %arg5: memref<1x256xf32, #tpu.memory_space<vmem>>, %arg6: memref<32x64xbf16, #tpu.memory_space<vmem>>, %arg7: memref<1x64xf32, #tpu.memory_space<vmem>>, %arg8: memref<16x32xf32, #tpu.memory_space<vmem>>) attributes {dimension_semantics = [#tpu.dimension_semantics<parallel>], iteration_bounds = array<i64: 1>, scalar_prefetch = 0 : i64, scratch_operands = 0 : i64, tpu.core_type = #tpu.core_type<tc>, window_params = [{transform_indices = @transform_0, window_bounds = array<i64: 16, 16>}, {pipeline_mode = #tpu.pipeline_mode<synchronous>, transform_indices = @transform_1, window_bounds = array<i64: 16, 384>}, {pipeline_mode = #tpu.pipeline_mode<synchronous>, transform_indices = @transform_2, window_bounds = array<i64: 1, 384>}, {pipeline_mode = #tpu.pipeline_mode<synchronous>, transform_indices = @transform_3, window_bounds = array<i64: 384, 256>}, {pipeline_mode = #tpu.pipeline_mode<synchronous>, transform_indices = @transform_4, window_bounds = array<i64: 1, 256>}, {pipeline_mode = #tpu.pipeline_mode<synchronous>, transform_indices = @transform_5, window_bounds = array<i64: 32, 64>}, {pipeline_mode = #tpu.pipeline_mode<synchronous>, transform_indices = @transform_6, window_bounds = array<i64: 1, 64>}, {transform_indices = @transform_7, window_bounds = array<i64: 16, 32>}]} {
    %c0 = arith.constant 0 : index
    %c0_0 = arith.constant 0 : index
    %0 = vector.load %arg1[%c0, %c0_0] : memref<16x16xi32, #tpu.memory_space<vmem>>, vector<16x16xi32>
    %1 = arith.sitofp %0 : vector<16x16xi32> to vector<16x16xf32>
    %c0_1 = arith.constant 0 : index
    %c0_2 = arith.constant 0 : index
    %2 = vector.load %arg2[%c0_1, %c0_2] : memref<16x384xf32, #tpu.memory_space<vmem>>, vector<16x384xf32>
    %cst = arith.constant dense<0.000000e+00> : vector<16x384xf32>
    %3 = tpu.matmul %1, %2, %cst {dimension_numbers = #tpu.dot_dimension_numbers<[1], [0], [0], [1], [0, 0, 1, 1], [], []>} : vector<16x16xf32>, vector<16x384xf32>, vector<16x384xf32> -> vector<16x384xf32>
    %c0_3 = arith.constant 0 : index
    %c0_4 = arith.constant 0 : index
    %4 = vector.load %arg3[%c0_3, %c0_4] : memref<1x384xf32, #tpu.memory_space<vmem>>, vector<1x384xf32>
    %5 = vector.broadcast %4 : vector<1x384xf32> to vector<16x384xf32>
    %6 = arith.subf %3, %5 : vector<16x384xf32>
    %7 = math.absf %6 : vector<16x384xf32>
    %cst_5 = arith.constant 5.000000e-01 : f32
    %8 = vector.broadcast %cst_5 : f32 to vector<16x384xf32>
    %9 = arith.cmpf olt, %7, %8 : vector<16x384xf32>
    %cst_6 = arith.constant 1.000000e+00 : f32
    %cst_7 = arith.constant 0.000000e+00 : f32
    %10 = vector.broadcast %cst_6 : f32 to vector<16x384xf32>
    %11 = vector.broadcast %cst_7 : f32 to vector<16x384xf32>
    %12 = arith.select %9, %10, %11 : vector<16x384xi1>, vector<16x384xf32>
    %13 = arith.truncf %12 : vector<16x384xf32> to vector<16x384xbf16>
    %c0_8 = arith.constant 0 : index
    %c0_9 = arith.constant 0 : index
    %14 = vector.load %arg4[%c0_8, %c0_9] : memref<384x256xbf16, #tpu.memory_space<vmem>>, vector<384x256xbf16>
    %cst_10 = arith.constant dense<0.000000e+00> : vector<16x256xf32>
    %15 = tpu.matmul %13, %14, %cst_10 {dimension_numbers = #tpu.dot_dimension_numbers<[1], [0], [0], [1], [0, 0, 1, 1], [], []>} : vector<16x384xbf16>, vector<384x256xbf16>, vector<16x256xf32> -> vector<16x256xf32>
    %c0_11 = arith.constant 0 : index
    %c0_12 = arith.constant 0 : index
    %16 = vector.load %arg5[%c0_11, %c0_12] : memref<1x256xf32, #tpu.memory_space<vmem>>, vector<1x256xf32>
    %17 = vector.broadcast %16 : vector<1x256xf32> to vector<16x256xf32>
    %18 = arith.addf %15, %17 : vector<16x256xf32>
    %cst_13 = arith.constant 0.000000e+00 : f32
    %19 = vector.broadcast %cst_13 : f32 to vector<16x256xf32>
    %20 = arith.maximumf %18, %19 : vector<16x256xf32>
    %21 = vector.extract_strided_slice %20 {offsets = [0, 0], sizes = [16, 32], strides = [1, 1]} : vector<16x256xf32> to vector<16x32xf32>
    %22 = vector.extract_strided_slice %20 {offsets = [0, 32], sizes = [16, 32], strides = [1, 1]} : vector<16x256xf32> to vector<16x32xf32>
    %23 = vector.extract_strided_slice %20 {offsets = [0, 64], sizes = [16, 32], strides = [1, 1]} : vector<16x256xf32> to vector<16x32xf32>
    %24 = vector.extract_strided_slice %20 {offsets = [0, 96], sizes = [16, 32], strides = [1, 1]} : vector<16x256xf32> to vector<16x32xf32>
    %25 = vector.extract_strided_slice %20 {offsets = [0, 128], sizes = [16, 32], strides = [1, 1]} : vector<16x256xf32> to vector<16x32xf32>
    %26 = vector.extract_strided_slice %20 {offsets = [0, 160], sizes = [16, 32], strides = [1, 1]} : vector<16x256xf32> to vector<16x32xf32>
    %27 = vector.extract_strided_slice %20 {offsets = [0, 192], sizes = [16, 32], strides = [1, 1]} : vector<16x256xf32> to vector<16x32xf32>
    %28 = vector.extract_strided_slice %20 {offsets = [0, 224], sizes = [16, 32], strides = [1, 1]} : vector<16x256xf32> to vector<16x32xf32>
    %29 = arith.maximumf %21, %22 : vector<16x32xf32>
    %30 = arith.maximumf %23, %24 : vector<16x32xf32>
    %31 = arith.maximumf %25, %26 : vector<16x32xf32>
    %32 = arith.maximumf %27, %28 : vector<16x32xf32>
    %33 = arith.maximumf %29, %30 : vector<16x32xf32>
    %34 = arith.maximumf %31, %32 : vector<16x32xf32>
    %35 = arith.maximumf %33, %34 : vector<16x32xf32>
    %36 = arith.truncf %35 : vector<16x32xf32> to vector<16x32xbf16>
    %c0_14 = arith.constant 0 : index
    %c0_15 = arith.constant 0 : index
    %37 = vector.load %arg6[%c0_14, %c0_15] : memref<32x64xbf16, #tpu.memory_space<vmem>>, vector<32x64xbf16>
    %cst_16 = arith.constant dense<0.000000e+00> : vector<16x64xf32>
    %38 = tpu.matmul %36, %37, %cst_16 {dimension_numbers = #tpu.dot_dimension_numbers<[1], [0], [0], [1], [0, 0, 1, 1], [], []>} : vector<16x32xbf16>, vector<32x64xbf16>, vector<16x64xf32> -> vector<16x64xf32>
    %c0_17 = arith.constant 0 : index
    %c0_18 = arith.constant 0 : index
    %39 = vector.load %arg7[%c0_17, %c0_18] : memref<1x64xf32, #tpu.memory_space<vmem>>, vector<1x64xf32>
    %40 = vector.broadcast %39 : vector<1x64xf32> to vector<16x64xf32>
    %41 = arith.addf %38, %40 : vector<16x64xf32>
    %42 = vector.extract_strided_slice %41 {offsets = [0, 0], sizes = [16, 32], strides = [1, 1]} : vector<16x64xf32> to vector<16x32xf32>
    %cst_19 = arith.constant 0.000000e+00 : f32
    %43 = vector.broadcast %cst_19 : f32 to vector<16x32xf32>
    %44 = arith.maximumf %42, %43 : vector<16x32xf32>
    %45 = vector.extract_strided_slice %41 {offsets = [0, 32], sizes = [16, 32], strides = [1, 1]} : vector<16x64xf32> to vector<16x32xf32>
    %46 = arith.negf %45 : vector<16x32xf32>
    %47 = math.exp %46 : vector<16x32xf32>
    %cst_20 = arith.constant 1.000000e+00 : f32
    %48 = vector.broadcast %cst_20 : f32 to vector<16x32xf32>
    %49 = arith.addf %48, %47 : vector<16x32xf32>
    %50 = arith.divf %48, %49 : vector<16x32xf32>
    %51 = arith.mulf %50, %44 : vector<16x32xf32>
    %cst_21 = arith.constant 1.000000e+00 : f32
    %52 = vector.broadcast %cst_21 : f32 to vector<16x32xf32>
    %53 = arith.subf %52, %50 : vector<16x32xf32>
    %54 = arith.mulf %53, %35 : vector<16x32xf32>
    %55 = arith.addf %51, %54 : vector<16x32xf32>
    %c0_22 = arith.constant 0 : index
    %c0_23 = arith.constant 0 : index
    %56 = vector.load %arg8[%c0_22, %c0_23] : memref<16x32xf32, #tpu.memory_space<vmem>>, vector<16x32xf32>
    tpu.vector_store %arg8[%c0_22, %c0_23], %55 {strides = array<i32>} : memref<16x32xf32, #tpu.memory_space<vmem>>, vector<16x32xf32>,
    return
  }
  func.func @transform_0(%arg0: i32) -> (i32, i32) {
    %c0_i32 = arith.constant 0 : i32
    %c0_i32_0 = arith.constant 0 : i32
    return %arg0, %c0_i32 : i32, i32
  }
  func.func @transform_1(%arg0: i32) -> (i32, i32) {
    %c0_i32 = arith.constant 0 : i32
    %c0_i32_0 = arith.constant 0 : i32
    %c0_i32_1 = arith.constant 0 : i32
    return %c0_i32, %c0_i32_0 : i32, i32
  }
  func.func @transform_2(%arg0: i32) -> (i32, i32) {
    %c0_i32 = arith.constant 0 : i32
    %c0_i32_0 = arith.constant 0 : i32
    %c0_i32_1 = arith.constant 0 : i32
    return %c0_i32, %c0_i32_0 : i32, i32
  }
  func.func @transform_3(%arg0: i32) -> (i32, i32) {
    %c0_i32 = arith.constant 0 : i32
    %c0_i32_0 = arith.constant 0 : i32
    %c0_i32_1 = arith.constant 0 : i32
    return %c0_i32, %c0_i32_0 : i32, i32
  }
  func.func @transform_4(%arg0: i32) -> (i32, i32) {
    %c0_i32 = arith.constant 0 : i32
    %c0_i32_0 = arith.constant 0 : i32
    %c0_i32_1 = arith.constant 0 : i32
    return %c0_i32, %c0_i32_0 : i32, i32
  }
  func.func @transform_5(%arg0: i32) -> (i32, i32) {
    %c0_i32 = arith.constant 0 : i32
    %c0_i32_0 = arith.constant 0 : i32
    %c0_i32_1 = arith.constant 0 : i32
    return %c0_i32, %c0_i32_0 : i32, i32
  }
  func.func @transform_6(%arg0: i32) -> (i32, i32) {
    %c0_i32 = arith.constant 0 : i32
    %c0_i32_0 = arith.constant 0 : i32
    %c0_i32_1 = arith.constant 0 : i32
    return %c0_i32, %c0_i32_0 : i32, i32
  }
  func.func @transform_7(%arg0: i32) -> (i32, i32) {
    %c0_i32 = arith.constant 0 : i32
    %c0_i32_0 = arith.constant 0 : i32
    return %arg0, %c0_i32 : i32, i32
  }
}

</mosaic_0001>

<llo_original>
// kernel: model_embeddings_forward.1
$region0: #{model_embeddings_forward.1}
  #allocation0 [shape = 'u32[]', space=smem, size = 0x4, offset = 0x4, fixed_abs, tag = 'smem constant byte address 0x4 - core index']
  #allocation1 [shape = 'u32[72,128]{1,0:T(1,128)}', space=vmem, size = 0x9000, scoped, tag = 'internal scratch']
  %s0 = inlined_call_operand.vmem [shape: s32[16,16], index: 0, kind: input, shape index: {}]
  %s1 = inlined_call_operand.hbm [shape: f32[16,384], index: 1, kind: input, shape index: {}]
  %s2 = inlined_call_operand.vmem [shape: f32[1,384], index: 2, kind: input, shape index: {}]
  %s3 = inlined_call_operand.hbm [shape: bf16[384,256], index: 3, kind: input, shape index: {}]
  %s4 = inlined_call_operand.vmem [shape: f32[1,256], index: 4, kind: input, shape index: {}]
  %s5 = inlined_call_operand.vmem [shape: bf16[32,64], index: 5, kind: input, shape index: {}]
  %s6 = inlined_call_operand.vmem [shape: f32[1,64], index: 6, kind: input, shape index: {}]
  %s7 = inlined_call_operand.hbm [shape: f32[16,32], index: 7, kind: output, shape index: {}]
  %s8 = sld [smem:[#allocation0]]
  $region46: #{model_embeddings_forward.1} parent=0
    _
  %s10 = ssub.s32 1, %s8
  %s11 = scalar_select 0, %s10, %s8
  $region1: #{model_embeddings_forward.1} parent=0
    #allocation2 [shape = 'u8[24576]{0}', space=vmem, size = 0x6000, scoped, tag = 'input window, operand 1, single buffered']
    #allocation3 [shape = 's32[1]{0}', space=sflag, size = 0x4, scoped, tag = 'scoped memory for model_embeddings_forward.1']
    #allocation4 [shape = 's32[1]{0}', space=sflag, size = 0x4, scoped, tag = 'scoped memory for model_embeddings_forward.1']
    #allocation5 [shape = 'u8[196608]{0}', space=vmem, size = 0x30000, scoped, tag = 'input window, operand 3, single buffered']
    #allocation6 [shape = 's32[1]{0}', space=sflag, size = 0x4, scoped, tag = 'scoped memory for model_embeddings_forward.1']
    #allocation7 [shape = 'u8[8192]{0}', space=vmem, size = 0x2000, scoped, tag = 'output window, operand 0, single buffered']
    %12 = vsyncpa [#allocation3], 0
    %13 = vsyncpa [#allocation6], 0
    %14 = vsyncpa [#allocation4], 0
    // Predicated region
    $region2: #{model_embeddings_forward.1} parent=1 // pred_check
      _
    $region3: #{model_embeddings_forward.1} parent=1 // pred_check_branch
      %16 = sbr.rel (0) target = $region5
    $region4: #{model_embeddings_forward.1} parent=1 // pred_region
      _
    $region5: #{model_embeddings_forward.1} parent=1 // pred_fallthru
      _
    // Predicated region
    $region6: #{model_embeddings_forward.1} parent=1 // pred_check
      _
    $region7: #{model_embeddings_forward.1} parent=1 // pred_check_branch
      %18 = sbr.rel (0) target = $region9
    $region8: #{model_embeddings_forward.1} parent=1 // pred_region
      %20 = vsyncadd [#allocation3], 0
      %s21 = sshll.u32 %s1, 4
      %s22 = int_to_ptr.hbm [resolvable:$true] %s21
      %s23 = sshll.u32 [#allocation2], 4
      %s24 = int_to_ptr.vmem [resolvable:$true] %s23
      %29 = dma.hbm_to_vmem [thread:$0]  %s22, 768, %s24, [#allocation3], 384, 384, 24
    $region9: #{model_embeddings_forward.1} parent=1 // pred_fallthru
      _
    // Predicated region
    $region10: #{model_embeddings_forward.1} parent=1 // pred_check
      _
    $region11: #{model_embeddings_forward.1} parent=1 // pred_check_branch
      %31 = sbr.rel (0) target = $region13
    $region12: #{model_embeddings_forward.1} parent=1 // pred_region
      _
    $region13: #{model_embeddings_forward.1} parent=1 // pred_fallthru
      _
    // Predicated region
    $region14: #{model_embeddings_forward.1} parent=1 // pred_check
      _
    $region15: #{model_embeddings_forward.1} parent=1 // pred_check_branch
      %33 = sbr.rel (0) target = $region17
    $region16: #{model_embeddings_forward.1} parent=1 // pred_region
      %35 = vsyncadd [#allocation6], 0
      %s36 = sshll.u32 %s3, 4
      %s37 = int_to_ptr.hbm [resolvable:$true] %s36
      %s38 = sshll.u32 [#allocation5], 4
      %s39 = int_to_ptr.vmem [resolvable:$true] %s38
      %44 = dma.hbm_to_vmem [thread:$0]  %s37, 6144, %s39, [#allocation6], 128, 128, 8
    $region17: #{model_embeddings_forward.1} parent=1 // pred_fallthru
      _
    // Predicated region
    $region18: #{model_embeddings_forward.1} parent=1 // pred_check
      _
    $region19: #{model_embeddings_forward.1} parent=1 // pred_check_branch
      %46 = sbr.rel (0) target = $region21
    $region20: #{model_embeddings_forward.1} parent=1 // pred_region
      _
    $region21: #{model_embeddings_forward.1} parent=1 // pred_fallthru
      _
    // Predicated region
    $region22: #{model_embeddings_forward.1} parent=1 // pred_check
      _
    $region23: #{model_embeddings_forward.1} parent=1 // pred_check_branch
      %48 = sbr.rel (0) target = $region25
    $region24: #{model_embeddings_forward.1} parent=1 // pred_region
      _
    $region25: #{model_embeddings_forward.1} parent=1 // pred_fallthru
      _
    // Predicated region
    $region26: #{model_embeddings_forward.1} parent=1 // pred_check
      _
    $region27: #{model_embeddings_forward.1} parent=1 // pred_check_branch
      %50 = sbr.rel (0) target = $region29
    $region28: #{model_embeddings_forward.1} parent=1 // pred_region
      _
    $region29: #{model_embeddings_forward.1} parent=1 // pred_fallthru
      _
    // Predicated region
    $region30: #{model_embeddings_forward.1} parent=1 // pred_check
      _
    $region31: #{model_embeddings_forward.1} parent=1 // pred_check_branch
      %52 = sbr.rel (0) target = $region33
    $region32: #{model_embeddings_forward.1} parent=1 // pred_region
      %54 = dma.done [#allocation3], 768
    $region33: #{model_embeddings_forward.1} parent=1 // pred_fallthru
      _
    // Predicated region
    $region34: #{model_embeddings_forward.1} parent=1 // pred_check
      _
    $region35: #{model_embeddings_forward.1} parent=1 // pred_check_branch
      %56 = sbr.rel (0) target = $region37
    $region36: #{model_embeddings_forward.1} parent=1 // pred_region
      %58 = dma.done [#allocation6], 6144
    $region37: #{model_embeddings_forward.1} parent=1 // pred_fallthru
      _
    %v60 = vld [vmem:[%s0] sm:$0xff]
    %v61 = vld [vmem:[%s0 + $0x8] sm:$0xff]
    %v62 = vcvt.s32.f32 %v60
    %v63 = vcvt.s32.f32 %v61
    %v64 = vld [vmem:[#allocation2] sm:$0xff]
    %v65 = vld [vmem:[#allocation2 + $0x8] sm:$0xff]
    %v66 = vld [vmem:[#allocation2 + $0x10] sm:$0xff]
    %v67 = vld [vmem:[#allocation2 + $0x18] sm:$0xff]
    %v68 = vld [vmem:[#allocation2 + $0x20] sm:$0xff]
    %v69 = vld [vmem:[#allocation2 + $0x28] sm:$0xff]
    %vm70 = vcmask 130048
    %v72 = vsel %vm70, %v62, 0
    %v75 = vsel %vm70, %v63, 0
    %77 = vmatpush.msra.mxu0 0.0
    %78 = vmatpush.msra.mxu0 0.0
    %79 = vmatpush.msra.mxu0 0.0
    %80 = vmatpush.msra.mxu0 0.0
    %81 = vmatpush.msra.mxu0 0.0
    %82 = vmatpush.msra.mxu0 0.0
    %83 = vmatpush.msra.mxu0 0.0
    %84 = vmatpush.msra.mxu0 0.0
    %85 = vmatpush.msra.mxu0 0.0
    %86 = vmatpush.msra.mxu0 0.0
    %87 = vmatpush.msra.mxu0 0.0
    %88 = vmatpush.msra.mxu0 0.0
    %89 = vmatpush.msra.mxu0 0.0
    %90 = vmatpush.msra.mxu0 0.0
    %91 = vmatpush.msra.mxu0 %v67
    %92 = vmatpush.msra.mxu0 %v64
    %93 = vmatmul.f32.gmra.mxu0 %v72
    %v94 = vpop.f32.mrf.mxu0
    %v95 = vadd.f32 0.0, %v94
    %96 = vmatmul.f32.gmra.mxu0 %v75
    %v97 = vpop.f32.mrf.mxu0
    %v98 = vadd.f32 0.0, %v97
    %99 = vdwg.mxu0
    %100 = vmatpush.msra.mxu0 0.0
    %101 = vmatpush.msra.mxu0 0.0
    %102 = vmatpush.msra.mxu0 0.0
    %103 = vmatpush.msra.mxu0 0.0
    %104 = vmatpush.msra.mxu0 0.0
    %105 = vmatpush.msra.mxu0 0.0
    %106 = vmatpush.msra.mxu0 0.0
    %107 = vmatpush.msra.mxu0 0.0
    %108 = vmatpush.msra.mxu0 0.0
    %109 = vmatpush.msra.mxu0 0.0
    %110 = vmatpush.msra.mxu0 0.0
    %111 = vmatpush.msra.mxu0 0.0
    %112 = vmatpush.msra.mxu0 0.0
    %113 = vmatpush.msra.mxu0 0.0
    %114 = vmatpush.msra.mxu0 %v68
    %115 = vmatpush.msra.mxu0 %v65
    %116 = vmatmul.f32.gmra.mxu0 %v72
    %v117 = vpop.f32.mrf.mxu0
    %v118 = vadd.f32 0.0, %v117
    %119 = vmatmul.f32.gmra.mxu0 %v75
    %v120 = vpop.f32.mrf.mxu0
    %v121 = vadd.f32 0.0, %v120
    %122 = vdwg.mxu0
    %123 = vmatpush.msra.mxu0 0.0
    %124 = vmatpush.msra.mxu0 0.0
    %125 = vmatpush.msra.mxu0 0.0
    %126 = vmatpush.msra.mxu0 0.0
    %127 = vmatpush.msra.mxu0 0.0
    %128 = vmatpush.msra.mxu0 0.0
    %129 = vmatpush.msra.mxu0 0.0
    %130 = vmatpush.msra.mxu0 0.0
    %131 = vmatpush.msra.mxu0 0.0
    %132 = vmatpush.msra.mxu0 0.0
    %133 = vmatpush.msra.mxu0 0.0
    %134 = vmatpush.msra.mxu0 0.0
    %135 = vmatpush.msra.mxu0 0.0
    %136 = vmatpush.msra.mxu0 0.0
    %137 = vmatpush.msra.mxu0 %v69
    %138 = vmatpush.msra.mxu0 %v66
    %139 = vmatmul.f32.gmra.mxu0 %v72
    %v140 = vpop.f32.mrf.mxu0
    %v141 = vadd.f32 0.0, %v140
    %142 = vmatmul.f32.gmra.mxu0 %v75
    %v143 = vpop.f32.mrf.mxu0
    %v144 = vadd.f32 0.0, %v143
    %145 = vdwg.mxu0
    %v146 = vld [vmem:[%s2] sm:$0x7]
    %v148 = vperm.slane %v146, 0
    %v149 = vperm.slane %v146, 1
    %v150 = vperm.slane %v146, 2
    %v154 = vsub.f32 %v95, %v148
    %v155 = vsub.f32 %v118, %v149
    %v156 = vsub.f32 %v141, %v150
    %v157 = vsub.f32 %v98, %v148
    %v158 = vsub.f32 %v121, %v149
    %v159 = vsub.f32 %v144, %v150
    %v160 = vand.u32 2147483647, %v154
    %v161 = vand.u32 2147483647, %v155
    %v162 = vand.u32 2147483647, %v156
    %v163 = vand.u32 2147483647, %v157
    %v164 = vand.u32 2147483647, %v158
    %v165 = vand.u32 2147483647, %v159
    %vm166 = vcmp.lt.f32.partialorder %v160, 0.5
    %vm167 = vcmp.lt.f32.partialorder %v161, 0.5
    %vm168 = vcmp.lt.f32.partialorder %v162, 0.5
    %vm169 = vcmp.lt.f32.partialorder %v163, 0.5
    %vm170 = vcmp.lt.f32.partialorder %v164, 0.5
    %vm171 = vcmp.lt.f32.partialorder %v165, 0.5
    %v172 = vsel %vm166, 1.0, 0.0
    %v173 = vsel %vm167, 1.0, 0.0
    %v174 = vsel %vm168, 1.0, 0.0
    %v175 = vsel %vm169, 1.0, 0.0
    %v176 = vsel %vm170, 1.0, 0.0
    %v177 = vsel %vm171, 1.0, 0.0
    %v178 = vpack.c.bf16 %v175, %v172
    %v179 = vpack.c.bf16 %v176, %v173
    %v180 = vpack.c.bf16 %v177, %v174
    %v181 = vld [vmem:[#allocation5] sm:$0xff]
    %v182 = vld [vmem:[#allocation5 + $0x8] sm:$0xff]
    %v183 = vld [vmem:[#allocation5 + $0x10] sm:$0xff]
    %v184 = vld [vmem:[#allocation5 + $0x18] sm:$0xff]
    %v185 = vld [vmem:[#allocation5 + $0x20] sm:$0xff]
    %v186 = vld [vmem:[#allocation5 + $0x28] sm:$0xff]
    %v187 = vld [vmem:[#allocation5 + $0x30] sm:$0xff]
    %v188 = vld [vmem:[#allocation5 + $0x38] sm:$0xff]
    %v189 = vld [vmem:[#allocation5 + $0x40] sm:$0xff]
    %v190 = vld [vmem:[#allocation5 + $0x48] sm:$0xff]
    %v191 = vld [vmem:[#allocation5 + $0x50] sm:$0xff]
    %v192 = vld [vmem:[#allocation5 + $0x58] sm:$0xff]
    %v193 = vld [vmem:[#allocation5 + $0x60] sm:$0xff]
    %v194 = vld [vmem:[#allocation5 + $0x68] sm:$0xff]
    %v195 = vld [vmem:[#allocation5 + $0x70] sm:$0xff]
    %v196 = vld [vmem:[#allocation5 + $0x78] sm:$0xff]
    %v197 = vld [vmem:[#allocation5 + $0x80] sm:$0xff]
    %v198 = vld [vmem:[#allocation5 + $0x88] sm:$0xff]
    %v199 = vld [vmem:[#allocation5 + $0x90] sm:$0xff]
    %v200 = vld [vmem:[#allocation5 + $0x98] sm:$0xff]
    %v201 = vld [vmem:[#allocation5 + $0xa0] sm:$0xff]
    %v202 = vld [vmem:[#allocation5 + $0xa8] sm:$0xff]
    %v203 = vld [vmem:[#allocation5 + $0xb0] sm:$0xff]
    %v204 = vld [vmem:[#allocation5 + $0xb8] sm:$0xff]
    %v205 = vld [vmem:[#allocation5 + $0xc0] sm:$0xff]
    %v206 = vld [vmem:[#allocation5 + $0xc8] sm:$0xff]
    %v207 = vld [vmem:[#allocation5 + $0xd0] sm:$0xff]
    %v208 = vld [vmem:[#allocation5 + $0xd8] sm:$0xff]
    %v209 = vld [vmem:[#allocation5 + $0xe0] sm:$0xff]
    %v210 = vld [vmem:[#allocation5 + $0xe8] sm:$0xff]
    %v211 = vld [vmem:[#allocation5 + $0xf0] sm:$0xff]
    %v212 = vld [vmem:[#allocation5 + $0xf8] sm:$0xff]
    %v213 = vld [vmem:[#allocation5 + $0x100] sm:$0xff]
    %v214 = vld [vmem:[#allocation5 + $0x108] sm:$0xff]
    %v215 = vld [vmem:[#allocation5 + $0x110] sm:$0xff]
    %v216 = vld [vmem:[#allocation5 + $0x118] sm:$0xff]
    %v217 = vld [vmem:[#allocation5 + $0x120] sm:$0xff]
    %v218 = vld [vmem:[#allocation5 + $0x128] sm:$0xff]
    %v219 = vld [vmem:[#allocation5 + $0x130] sm:$0xff]
    %v220 = vld [vmem:[#allocation5 + $0x138] sm:$0xff]
    %v221 = vld [vmem:[#allocation5 + $0x140] sm:$0xff]
    %v222 = vld [vmem:[#allocation5 + $0x148] sm:$0xff]
    %v223 = vld [vmem:[#allocation5 + $0x150] sm:$0xff]
    %v224 = vld [vmem:[#allocation5 + $0x158] sm:$0xff]
    %v225 = vld [vmem:[#allocation5 + $0x160] sm:$0xff]
    %v226 = vld [vmem:[#allocation5 + $0x168] sm:$0xff]
    %v227 = vld [vmem:[#allocation5 + $0x170] sm:$0xff]
    %v228 = vld [vmem:[#allocation5 + $0x178] sm:$0xff]
    %v229 = vld [vmem:[%s4] sm:$0x3]
    %v231 = vperm.slane %v229, 0
    %v232 = vperm.slane %v229, 1
    %v283 = vunpack.c.l.b16 %v181
    %v284 = vunpack.c.h.b16 %v181
    %v285 = vunpack.c.l.b16 %v182
    %v286 = vunpack.c.h.b16 %v182
    %v287 = vunpack.c.l.b16 %v183
    %v288 = vunpack.c.h.b16 %v183
    %v289 = vunpack.c.l.b16 %v184
    %v290 = vunpack.c.h.b16 %v184
    %v291 = vunpack.c.l.b16 %v185
    %v292 = vunpack.c.h.b16 %v185
    %v293 = vunpack.c.l.b16 %v186
    %v294 = vunpack.c.h.b16 %v186
    %v295 = vunpack.c.l.b16 %v187
    %v296 = vunpack.c.h.b16 %v187
    %v297 = vunpack.c.l.b16 %v188
    %v298 = vunpack.c.h.b16 %v188
    %v299 = vunpack.c.l.b16 %v189
    %v300 = vunpack.c.h.b16 %v189
    %v301 = vunpack.c.l.b16 %v190
    %v302 = vunpack.c.h.b16 %v190
    %v303 = vunpack.c.l.b16 %v191
    %v304 = vunpack.c.h.b16 %v191
    %v305 = vunpack.c.l.b16 %v192
    %v306 = vunpack.c.h.b16 %v192
    %v307 = vunpack.c.l.b16 %v193
    %v308 = vunpack.c.h.b16 %v193
    %v309 = vunpack.c.l.b16 %v194
    %v310 = vunpack.c.h.b16 %v194
    %v311 = vunpack.c.l.b16 %v195
    %v312 = vunpack.c.h.b16 %v195
    %v313 = vunpack.c.l.b16 %v196
    %v314 = vunpack.c.h.b16 %v196
    %v315 = vunpack.c.l.b16 %v197
    %v316 = vunpack.c.h.b16 %v197
    %v317 = vunpack.c.l.b16 %v198
    %v318 = vunpack.c.h.b16 %v198
    %v319 = vunpack.c.l.b16 %v199
    %v320 = vunpack.c.h.b16 %v199
    %v321 = vunpack.c.l.b16 %v200
    %v322 = vunpack.c.h.b16 %v200
    %v323 = vunpack.c.l.b16 %v201
    %v324 = vunpack.c.h.b16 %v201
    %v325 = vunpack.c.l.b16 %v202
    %v326 = vunpack.c.h.b16 %v202
    %v327 = vunpack.c.l.b16 %v203
    %v328 = vunpack.c.h.b16 %v203
    %v329 = vunpack.c.l.b16 %v204
    %v330 = vunpack.c.h.b16 %v204
    %v331 = vunpack.c.l.b16 %v205
    %v332 = vunpack.c.h.b16 %v205
    %v333 = vunpack.c.l.b16 %v206
    %v334 = vunpack.c.h.b16 %v206
    %v335 = vunpack.c.l.b16 %v207
    %v336 = vunpack.c.h.b16 %v207
    %v337 = vunpack.c.l.b16 %v208
    %v338 = vunpack.c.h.b16 %v208
    %v339 = vunpack.c.l.b16 %v209
    %v340 = vunpack.c.h.b16 %v209
    %v341 = vunpack.c.l.b16 %v210
    %v342 = vunpack.c.h.b16 %v210
    %v343 = vunpack.c.l.b16 %v211
    %v344 = vunpack.c.h.b16 %v211
    %v345 = vunpack.c.l.b16 %v212
    %v346 = vunpack.c.h.b16 %v212
    %v347 = vunpack.c.l.b16 %v213
    %v348 = vunpack.c.h.b16 %v213
    %v349 = vunpack.c.l.b16 %v214
    %v350 = vunpack.c.h.b16 %v214
    %v351 = vunpack.c.l.b16 %v215
    %v352 = vunpack.c.h.b16 %v215
    %v353 = vunpack.c.l.b16 %v216
    %v354 = vunpack.c.h.b16 %v216
    %v355 = vunpack.c.l.b16 %v217
    %v356 = vunpack.c.h.b16 %v217
    %v357 = vunpack.c.l.b16 %v218
    %v358 = vunpack.c.h.b16 %v218
    %v359 = vunpack.c.l.b16 %v219
    %v360 = vunpack.c.h.b16 %v219
    %v361 = vunpack.c.l.b16 %v220
    %v362 = vunpack.c.h.b16 %v220
    %v363 = vunpack.c.l.b16 %v221
    %v364 = vunpack.c.h.b16 %v221
    %v365 = vunpack.c.l.b16 %v222
    %v366 = vunpack.c.h.b16 %v222
    %v367 = vunpack.c.l.b16 %v223
    %v368 = vunpack.c.h.b16 %v223
    %v369 = vunpack.c.l.b16 %v224
    %v370 = vunpack.c.h.b16 %v224
    %v371 = vunpack.c.l.b16 %v225
    %v372 = vunpack.c.h.b16 %v225
    %v373 = vunpack.c.l.b16 %v226
    %v374 = vunpack.c.h.b16 %v226
    %v375 = vunpack.c.l.b16 %v227
    %v376 = vunpack.c.h.b16 %v227
    %v377 = vunpack.c.l.b16 %v228
    %v378 = vunpack.c.h.b16 %v228
    %v379 = vpack.c.b16 %v285, %v283
    %v380 = vpack.c.b16 %v286, %v284
    %v381 = vpack.c.b16 %v289, %v287
    %v382 = vpack.c.b16 %v290, %v288
    %v383 = vpack.c.b16 %v293, %v291
    %v384 = vpack.c.b16 %v294, %v292
    %v385 = vpack.c.b16 %v297, %v295
    %v386 = vpack.c.b16 %v298, %v296
    %v387 = vpack.c.b16 %v301, %v299
    %v388 = vpack.c.b16 %v302, %v300
    %v389 = vpack.c.b16 %v305, %v303
    %v390 = vpack.c.b16 %v306, %v304
    %v391 = vpack.c.b16 %v309, %v307
    %v392 = vpack.c.b16 %v310, %v308
    %v393 = vpack.c.b16 %v313, %v311
    %v394 = vpack.c.b16 %v314, %v312
    %v395 = vpack.c.b16 %v317, %v315
    %v396 = vpack.c.b16 %v318, %v316
    %v397 = vpack.c.b16 %v321, %v319
    %v398 = vpack.c.b16 %v322, %v320
    %v399 = vpack.c.b16 %v325, %v323
    %v400 = vpack.c.b16 %v326, %v324
    %v401 = vpack.c.b16 %v329, %v327
    %v402 = vpack.c.b16 %v330, %v328
    %v403 = vpack.c.b16 %v333, %v331
    %v404 = vpack.c.b16 %v334, %v332
    %v405 = vpack.c.b16 %v337, %v335
    %v406 = vpack.c.b16 %v338, %v336
    %v407 = vpack.c.b16 %v341, %v339
    %v408 = vpack.c.b16 %v342, %v340
    %v409 = vpack.c.b16 %v345, %v343
    %v410 = vpack.c.b16 %v346, %v344
    %v411 = vpack.c.b16 %v349, %v347
    %v412 = vpack.c.b16 %v350, %v348
    %v413 = vpack.c.b16 %v353, %v351
    %v414 = vpack.c.b16 %v354, %v352
    %v415 = vpack.c.b16 %v357, %v355
    %v416 = vpack.c.b16 %v358, %v356
    %v417 = vpack.c.b16 %v361, %v359
    %v418 = vpack.c.b16 %v362, %v360
    %v419 = vpack.c.b16 %v365, %v363
    %v420 = vpack.c.b16 %v366, %v364
    %v421 = vpack.c.b16 %v369, %v367
    %v422 = vpack.c.b16 %v370, %v368
    %v423 = vpack.c.b16 %v373, %v371
    %v424 = vpack.c.b16 %v374, %v372
    %v425 = vpack.c.b16 %v377, %v375
    %v426 = vpack.c.b16 %v378, %v376
    %475 = vmatpush.bf16.msra.mxu0 %v393
    %476 = vmatpush.bf16.msra.mxu0 %v391
    %477 = vmatpush.bf16.msra.mxu0 %v389
    %478 = vmatpush.bf16.msra.mxu0 %v387
    %479 = vmatpush.bf16.msra.mxu0 %v385
    %480 = vmatpush.bf16.msra.mxu0 %v383
    %481 = vmatpush.bf16.msra.mxu0 %v381
    %482 = vmatpush.bf16.msra.mxu0 %v379
    %483 = vmatmul.bf16.gmra.mxu0 %v178
    %v484 = vpop.f32.mrf.mxu0
    %v485 = vadd.f32 %v231, %v484
    %v486 = vpop.f32.mrf.mxu0
    %v487 = vadd.f32 %v231, %v486
    %488 = vdwg.mxu0
    %489 = vmatpush.bf16.msra.mxu0 %v409
    %490 = vmatpush.bf16.msra.mxu0 %v407
    %491 = vmatpush.bf16.msra.mxu0 %v405
    %492 = vmatpush.bf16.msra.mxu0 %v403
    %493 = vmatpush.bf16.msra.mxu0 %v401
    %494 = vmatpush.bf16.msra.mxu0 %v399
    %495 = vmatpush.bf16.msra.mxu0 %v397
    %496 = vmatpush.bf16.msra.mxu0 %v395
    %497 = vmatmul.bf16.gmra.mxu0 %v179
    %v498 = vpop.f32.mrf.mxu0
    %v499 = vadd.f32 %v485, %v498
    %v500 = vpop.f32.mrf.mxu0
    %v501 = vadd.f32 %v487, %v500
    %502 = vdwg.mxu0
    %503 = vmatpush.bf16.msra.mxu0 %v425
    %504 = vmatpush.bf16.msra.mxu0 %v423
    %505 = vmatpush.bf16.msra.mxu0 %v421
    %506 = vmatpush.bf16.msra.mxu0 %v419
    %507 = vmatpush.bf16.msra.mxu0 %v417
    %508 = vmatpush.bf16.msra.mxu0 %v415
    %509 = vmatpush.bf16.msra.mxu0 %v413
    %510 = vmatpush.bf16.msra.mxu0 %v411
    %511 = vmatmul.bf16.gmra.mxu0 %v180
    %v512 = vpop.f32.mrf.mxu0
    %v513 = vadd.f32 %v499, %v512
    %v514 = vpop.f32.mrf.mxu0
    %v515 = vadd.f32 %v501, %v514
    %516 = vdwg.mxu0
    %517 = vmatpush.bf16.msra.mxu0 %v394
    %518 = vmatpush.bf16.msra.mxu0 %v392
    %519 = vmatpush.bf16.msra.mxu0 %v390
    %520 = vmatpush.bf16.msra.mxu0 %v388
    %521 = vmatpush.bf16.msra.mxu0 %v386
    %522 = vmatpush.bf16.msra.mxu0 %v384
    %523 = vmatpush.bf16.msra.mxu0 %v382
    %524 = vmatpush.bf16.msra.mxu0 %v380
    %525 = vmatmul.bf16.gmra.mxu0 %v178
    %v526 = vpop.f32.mrf.mxu0
    %v527 = vadd.f32 %v232, %v526
    %v528 = vpop.f32.mrf.mxu0
    %v529 = vadd.f32 %v232, %v528
    %530 = vdwg.mxu0
    %531 = vmatpush.bf16.msra.mxu0 %v410
    %532 = vmatpush.bf16.msra.mxu0 %v408
    %533 = vmatpush.bf16.msra.mxu0 %v406
    %534 = vmatpush.bf16.msra.mxu0 %v404
    %535 = vmatpush.bf16.msra.mxu0 %v402
    %536 = vmatpush.bf16.msra.mxu0 %v400
    %537 = vmatpush.bf16.msra.mxu0 %v398
    %538 = vmatpush.bf16.msra.mxu0 %v396
    %539 = vmatmul.bf16.gmra.mxu0 %v179
    %v540 = vpop.f32.mrf.mxu0
    %v541 = vadd.f32 %v527, %v540
    %v542 = vpop.f32.mrf.mxu0
    %v543 = vadd.f32 %v529, %v542
    %544 = vdwg.mxu0
    %545 = vmatpush.bf16.msra.mxu0 %v426
    %546 = vmatpush.bf16.msra.mxu0 %v424
    %547 = vmatpush.bf16.msra.mxu0 %v422
    %548 = vmatpush.bf16.msra.mxu0 %v420
    %549 = vmatpush.bf16.msra.mxu0 %v418
    %550 = vmatpush.bf16.msra.mxu0 %v416
    %551 = vmatpush.bf16.msra.mxu0 %v414
    %552 = vmatpush.bf16.msra.mxu0 %v412
    %553 = vmatmul.bf16.gmra.mxu0 %v180
    %v554 = vpop.f32.mrf.mxu0
    %v555 = vadd.f32 %v541, %v554
    %v556 = vpop.f32.mrf.mxu0
    %v557 = vadd.f32 %v543, %v556
    %558 = vdwg.mxu0
    %v559 = vmax.f32 %v513, 0.0
    %v560 = vmax.f32 %v555, 0.0
    %v561 = vmax.f32 %v515, 0.0
    %v562 = vmax.f32 %v557, 0.0
    %565 = vrot.lane.b32.xlu0 %v559, 96
    %v566 = vpop.permute.xlu0 %565
    %567 = vrot.lane.b32.xlu0 %v561, 96
    %v568 = vpop.permute.xlu0 %567
    %v571 = vmax.f32 %v559, %v566
    %v572 = vmax.f32 %v561, %v568
    %575 = vrot.lane.b32.xlu0 %v560, 96
    %v576 = vpop.permute.xlu0 %575
    %577 = vrot.lane.b32.xlu0 %v562, 96
    %v578 = vpop.permute.xlu0 %577
    %v581 = vmax.f32 %v560, %v576
    %v582 = vmax.f32 %v562, %v578
    %585 = vrot.lane.b32.xlu0 %v571, 64
    %v586 = vpop.permute.xlu0 %585
    %587 = vrot.lane.b32.xlu0 %v572, 64
    %v588 = vpop.permute.xlu0 %587
    %v591 = vmax.f32 %v571, %v586
    %v592 = vmax.f32 %v572, %v588
    %595 = vrot.lane.b32.xlu0 %v581, 64
    %v596 = vpop.permute.xlu0 %595
    %597 = vrot.lane.b32.xlu0 %v582, 64
    %v598 = vpop.permute.xlu0 %597
    %v601 = vmax.f32 %v581, %v596
    %v602 = vmax.f32 %v582, %v598
    %v603 = vmax.f32 %v591, %v601
    %v604 = vmax.f32 %v592, %v602
    %v605 = vpack.c.bf16 %v604, %v603
    %v606 = vld [vmem:[%s5] sm:$0xf]
    %v607 = vld [vmem:[%s5 + $0x4] sm:$0xf]
    %v608 = vld [vmem:[%s5 + $0x8] sm:$0xf]
    %v609 = vld [vmem:[%s5 + $0xc] sm:$0xf]
    %v610 = vld [vmem:[%s6] sm:$0x1]
    %v612 = vperm.slane %v610, 0
    %v618 = vunpack.c.l.b16 %v606
    %v619 = vunpack.c.l.b16 %v607
    %v620 = vunpack.c.l.b16 %v608
    %v621 = vunpack.c.l.b16 %v609
    %v622 = vpack.c.b16 %v619, %v618
    %v623 = vpack.c.b16 %v621, %v620
    %vm626 = vcmask 261120
    %v628 = vsel %vm626, %v605, 0
    %630 = vmatpush.bf16.msra.mxu0 0
    %631 = vmatpush.bf16.msra.mxu0 0
    %632 = vmatpush.bf16.msra.mxu0 0
    %633 = vmatpush.bf16.msra.mxu0 0
    %634 = vmatpush.bf16.msra.mxu0 0
    %635 = vmatpush.bf16.msra.mxu0 0
    %636 = vmatpush.bf16.msra.mxu0 %v623
    %637 = vmatpush.bf16.msra.mxu0 %v622
    %638 = vmatmul.bf16.gmra.mxu0 %v628
    %v639 = vpop.f32.mrf.mxu0
    %v640 = vadd.f32 %v612, %v639
    %v641 = vpop.f32.mrf.mxu0
    %v642 = vadd.f32 %v612, %v641
    %643 = vdwg.mxu0
    %v644 = vmax.f32 %v640, 0.0
    %v645 = vmax.f32 %v642, 0.0
    %v646 = vxor.u32 %v640, 2147483648
    %v647 = vxor.u32 %v642, 2147483648
    %v648 = vmul.f32 %v646, 1.442695
    %v649 = vpow.pop %v648
    %v650 = vmul.f32 %v647, 1.442695
    %v651 = vpow.pop %v650
    %v652 = vadd.f32 %v649, 1.0
    %v653 = vadd.f32 %v651, 1.0
    %v654 = vrcp.pop %v652
    %v655 = vmul.f32 %v652, %v654
    %v656 = vsub.f32 1.0, %v655
    %v657 = vmul.f32 %v654, %v656
    %v658 = vadd.f32 %v654, %v657
    %vm659 = vweird.f32 %v652
    %vm660 = vweird.f32 %v654
    %vm661 = vmor %vm659, %vm660
    %v662 = vsel %vm661, %v654, %v658
    %v663 = vand.u32 2147483647, %v652
    %vm664 = vcmp.eq.f32.partialorder %v663, 8.507059e+37
    %v665 = vand.u32 %v652, 2147483648
    %v666 = vor.u32 1.1754944e-38, %v665
    %v667 = vsel %vm664, %v666, %v662
    %v668 = vmul.f32 1.0, %v667
    %v669 = vrcp.pop %v653
    %v670 = vmul.f32 %v653, %v669
    %v671 = vsub.f32 1.0, %v670
    %v672 = vmul.f32 %v669, %v671
    %v673 = vadd.f32 %v669, %v672
    %vm674 = vweird.f32 %v653
    %vm675 = vweird.f32 %v669
    %vm676 = vmor %vm674, %vm675
    %v677 = vsel %vm676, %v669, %v673
    %v678 = vand.u32 2147483647, %v653
    %vm679 = vcmp.eq.f32.partialorder %v678, 8.507059e+37
    %v680 = vand.u32 %v653, 2147483648
    %v681 = vor.u32 1.1754944e-38, %v680
    %v682 = vsel %vm679, %v681, %v677
    %v683 = vmul.f32 1.0, %v682
    %686 = vrot.lane.b32.xlu0 %v644, 32
    %v687 = vpop.permute.xlu0 %686
    %688 = vrot.lane.b32.xlu0 %v645, 32
    %v689 = vpop.permute.xlu0 %688
    %v692 = vmul.f32 %v668, %v687
    %v693 = vmul.f32 %v683, %v689
    %v694 = vsub.f32 1.0, %v668
    %v695 = vsub.f32 1.0, %v683
    %698 = vrot.lane.b32.xlu0 %v603, 32
    %v699 = vpop.permute.xlu0 %698
    %700 = vrot.lane.b32.xlu0 %v604, 32
    %v701 = vpop.permute.xlu0 %700
    %v704 = vmul.f32 %v694, %v699
    %v705 = vmul.f32 %v695, %v701
    %v706 = vadd.f32 %v692, %v704
    %v707 = vadd.f32 %v693, %v705
    %710 = vrot.lane.b32.xlu0 %v706, 96
    %v711 = vpop.permute.xlu0 %710
    %712 = vrot.lane.b32.xlu0 %v707, 96
    %v713 = vpop.permute.xlu0 %712
    %716 = vst.msk [vmem:[#allocation7] sm:$0xff] %vm626, %v711
    %717 = vst.msk [vmem:[#allocation7 + $0x8] sm:$0xff] %vm626, %v713
    // Predicated region
    $region38: #{model_embeddings_forward.1} parent=1 // pred_check
      _
    $region39: #{model_embeddings_forward.1} parent=1 // pred_check_branch
      %719 = sbr.rel (0) target = $region41
    $region40: #{model_embeddings_forward.1} parent=1 // pred_region
      %721 = vsyncadd [#allocation4], 0
      %s722 = sshll.u32 [#allocation7], 4
      %s723 = int_to_ptr.vmem [resolvable:$true] %s722
      %s724 = sshll.u32 %s7, 4
      %s725 = int_to_ptr.hbm [resolvable:$true] %s724
      %730 = dma.vmem_to_hbm [thread:$0]  %s723, 256, %s725, [#allocation4], 128, 128, 8
    $region41: #{model_embeddings_forward.1} parent=1 // pred_fallthru
      _
    // Predicated region
    $region42: #{model_embeddings_forward.1} parent=1 // pred_check
      _
    $region43: #{model_embeddings_forward.1} parent=1 // pred_check_branch
      %732 = sbr.rel (0) target = $region45
    $region44: #{model_embeddings_forward.1} parent=1 // pred_region
      %734 = dma.done [#allocation4], 256
    $region45: #{model_embeddings_forward.1} parent=1 // pred_fallthru
      _
    %735 = vsyncpa [#allocation3], 1
    %736 = vsyncpa [#allocation6], 1
    %737 = vsyncpa [#allocation4], 1

</llo_original>
